<compile_context>
chip_gen: v6e
topology: v6e:2x2x1
jax: 0.10.0
libtpu: 0.0.40
codegen_flags: <defaults>
</compile_context>

<pallas_src>
import jax
import jax.numpy as jnp
from jax.experimental import pallas as pl
from jax.experimental.pallas import tpu as pltpu


def _round_up(x, m):
    return ((x + m - 1) // m) * m


def _vmem_capacity_bytes():
    """Physical VMEM per TensorCore; conservative (v7x-safe) fallback."""
    try:
        info = pltpu.get_tpu_info()
        cap = int(getattr(info, "vmem_capacity_bytes", 0))
        if cap > 0:
            return cap
    except Exception:
        pass
    return 64 << 20  # v7x per-TC capacity; safe lower bound for all gens


# --------------------------------------------------------------------------
# Kernels
# --------------------------------------------------------------------------
def _smmlp_kernel_f32(x_ref, wgu_ref, wd_ref, o_ref):
    """f32 output: accumulate directly into the resident output tile."""
    j = pl.program_id(2)
    ti = wd_ref.shape[0]

    # One fused MXU pass for gate+up: (tm, Hp) @ (Hp, 2*ti) -> (tm, 2*ti).
    gu = jnp.dot(x_ref[...], wgu_ref[...], preferred_element_type=jnp.float32)
    g = gu[:, :ti]
    u = gu[:, ti:]
    # SiLU gate in f32 (sigmoid on EUP slot, hidden under MXU work).
    h = (g * jax.nn.sigmoid(g)) * u
    d = jnp.dot(h.astype(wd_ref.dtype), wd_ref[...],
                preferred_element_type=jnp.float32)

    @pl.when(j == 0)
    def _():
        o_ref[...] = d

    @pl.when(j > 0)
    def _():
        o_ref[...] += d


def _smmlp_kernel_acc(x_ref, wgu_ref, wd_ref, o_ref, acc_ref):
    """Narrow output dtype: f32 VMEM accumulator, cast once at the end."""
    j = pl.program_id(2)
    ti = wd_ref.shape[0]

    @pl.when(j == 0)
    def _():
        acc_ref[...] = jnp.zeros_like(acc_ref)

    gu = jnp.dot(x_ref[...], wgu_ref[...], preferred_element_type=jnp.float32)
    g = gu[:, :ti]
    u = gu[:, ti:]
    h = (g * jax.nn.sigmoid(g)) * u
    acc_ref[...] += jnp.dot(h.astype(wd_ref.dtype), wd_ref[...],
                            preferred_element_type=jnp.float32)

    @pl.when(j == pl.num_programs(2) - 1)
    def _():
        o_ref[...] = acc_ref[...].astype(o_ref.dtype)


# --------------------------------------------------------------------------
# Wrapper
# --------------------------------------------------------------------------
def smmlp_pallas(x, w_gate, w_up, w_down, *, tm=None, ti=None, tl=None):
    """SwiGLU MLP: down_proj( SiLU(x @ w_gate) * (x @ w_up) ).

    x: (..., H); w_gate/w_up: (H, I); w_down: (I, L). Returns (..., L).

    tm/ti default per chip generation (derived from VMEM capacity):
      128 MiB parts (v5e/v6e): tm=1024, ti=512  -> MXU-bound weight streaming.
      64  MiB parts (v7x):     tm=512,  ti=512.
    tl defaults to the full padded L (single output-column tile).  Set tl to
    ~L/2 for small-M / decode shapes on v7x to give the second TensorCore work.
    """
    H, I = w_gate.shape
    I2, L = w_down.shape
    assert I2 == I, "w_up/w_gate and w_down intermediate dims must match"
    lead = x.shape[:-1]
    x2 = x.reshape(-1, H)
    M = x2.shape[0]

    xb = jnp.dtype(x2.dtype).itemsize
    wb = jnp.dtype(w_gate.dtype).itemsize
    ob = xb  # output dtype follows x dtype
    # Sublane multiple for the row (second-to-last) dim of the x / out tiles.
    sub = max(8, 32 // xb)

    vmem_cap = _vmem_capacity_bytes()

    # ---- generation-aware tile defaults -----------------------------------
    if tm is None:
        tm = 1024 if vmem_cap >= (100 << 20) else 512
    if ti is None:
        ti = 512

    # Lane-dense padded feature dims.
    Hp = _round_up(H, 128)
    if tl is None:
        tl = _round_up(L, 128)
    else:
        tl = _round_up(min(tl, _round_up(L, 128)), 128)
    Lp = _round_up(L, tl)

    # Row tile: multiple of 128 for large M (keeps MXU M-dim non-ragged),
    # sublane multiple for small M.
    if M >= 128:
        tm = _round_up(min(tm, _round_up(M, 128)), 128)
    else:
        tm = _round_up(M, sub)
    # Reduction tile (lane-dense).
    ti = _round_up(min(ti, _round_up(I, 128)), 128)

    # ---- VMEM budget (double-buffered tiles + acc + f32 intermediates) ----
    f32_out = jnp.dtype(x.dtype) == jnp.dtype(jnp.float32)

    def _vmem_need(tm_, ti_, tl_):
        tiles = (tm_ * Hp * xb          # x row tile
                 + Hp * 2 * ti_ * wb    # fused gate+up weight slab
                 + ti_ * tl_ * wb       # down_proj weight tile
                 + tm_ * tl_ * ob)      # output tile
        acc = 0 if f32_out else tm_ * tl_ * 4
        interm = 3 * tm_ * ti_ * 4      # gu (tm, 2*ti) f32 + h (tm, ti) f32
        return 2 * tiles + acc + interm

    budget = vmem_cap - (8 << 20)
    while _vmem_need(tm, ti, tl) > budget and (tm > 128 or ti > 128):
        if tm >= ti and tm > 128:
            tm = max(128 if M >= 128 else _round_up(M, sub), tm // 2)
            tm = _round_up(tm, 128) if M >= 128 else _round_up(tm, sub)
        elif ti > 128:
            ti = max(128, _round_up(ti // 2, 128))
        else:
            break

    Mp = _round_up(M, tm)
    Ip = _round_up(I, ti)
    nI = Ip // ti

    # ---- pad operands (zero padding is semantically a no-op) --------------
    if (Mp, Hp) != (M, H):
        x2 = jnp.pad(x2, ((0, Mp - M), (0, Hp - H)))
    if (Hp, Ip) != (H, I):
        w_gate = jnp.pad(w_gate, ((0, Hp - H), (0, Ip - I)))
        w_up = jnp.pad(w_up, ((0, Hp - H), (0, Ip - I)))
    if (Ip, Lp) != (I, L):
        w_down = jnp.pad(w_down, ((0, Ip - I), (0, Lp - L)))

    # Fuse gate+up into contiguous (nI, Hp, 2*ti) slabs: one contiguous weight
    # DMA and one MXU feed per reduction step (done once in the wrapper).
    wg_r = w_gate.reshape(Hp, nI, ti)
    wu_r = w_up.reshape(Hp, nI, ti)
    w_gu = jnp.transpose(jnp.concatenate([wg_r, wu_r], axis=2), (1, 0, 2))

    grid = (Mp // tm, Lp // tl, Ip // ti)
    nM, nL, nJ = grid

    need = _vmem_need(tm, ti, tl)
    vmem_limit = int(min(max(need + (4 << 20), 32 << 20), vmem_cap - (2 << 20)))
    vmem_limit = max(vmem_limit, 16 << 20)

    # CostEstimate: x is NOT re-fetched across the reduction axis; gate/up
    # weights are re-streamed once per (row-tile, L-tile); down weights once
    # per row tile.
    cost = pl.CostEstimate(
        flops=2 * Mp * (2 * Hp * Ip + Ip * Lp),
        transcendentals=Mp * Ip,
        bytes_accessed=int(Mp * Hp * xb
                           + 2 * Hp * Ip * wb * nM * nL
                           + Ip * Lp * wb * nM
                           + Mp * Lp * ob),
    )

    if f32_out:
        kernel = _smmlp_kernel_f32
        scratch_shapes = []
    else:
        kernel = _smmlp_kernel_acc
        scratch_shapes = [pltpu.VMEM((tm, tl), jnp.float32)]

    # TODO(synk): optional v7x decode path — auto-set tl≈L/2 when nM == 1 and
    # two TensorCores are present, so the second core gets output columns.
    out = pl.pallas_call(
        kernel,
        out_shape=jax.ShapeDtypeStruct((Mp, Lp), x.dtype),
        grid_spec=pltpu.PrefetchScalarGridSpec(
            num_scalar_prefetch=0,
            grid=grid,
            in_specs=[
                pl.BlockSpec((tm, Hp), lambda i, l, j: (i, 0)),        # x rows
                pl.BlockSpec((None, Hp, 2 * ti),
                             lambda i, l, j: (j, 0, 0)),               # gate+up slab
                pl.BlockSpec((ti, tl), lambda i, l, j: (j, l)),        # down rows
            ],
            out_specs=pl.BlockSpec((tm, tl), lambda i, l, j: (i, l)),
            scratch_shapes=scratch_shapes,
        ),
        compiler_params=pltpu.CompilerParams(
            dimension_semantics=("parallel", "parallel", "arbitrary"),
            vmem_limit_bytes=vmem_limit,
        ),
        cost_estimate=cost,
    )(x2, w_gu, w_down)

    return out[:M, :L].reshape(*lead, L)


def smmlp_reference(x, w_gate, w_up, w_down):
    g = x @ w_gate
    u = x @ w_up
    return (g * jax.nn.sigmoid(g) * u) @ w_down


if __name__ == "__main__":
    key = jax.random.PRNGKey(0)

    # ---- Test 1: small shapes consistent with the module (f32 path) -------
    #   hidden_size=32, intermediate_size=64, last_size=32, batch=2, seq=8
    hidden_size, intermediate_size, last_size = 32, 64, 32
    batch, seq = 2, 8

    k_x, k_g, k_u, k_d, key = jax.random.split(key, 5)
    x = jax.random.normal(k_x, (batch, seq, hidden_size), dtype=jnp.float32)

    scale_h = 1.0 / jnp.sqrt(hidden_size)
    scale_i = 1.0 / jnp.sqrt(intermediate_size)
    w_gate = jax.random.uniform(k_g, (hidden_size, intermediate_size),
                                minval=-scale_h, maxval=scale_h, dtype=jnp.float32)
    w_up = jax.random.uniform(k_u, (hidden_size, intermediate_size),
                              minval=-scale_h, maxval=scale_h, dtype=jnp.float32)
    w_down = jax.random.uniform(k_d, (intermediate_size, last_size),
                                minval=-scale_i, maxval=scale_i, dtype=jnp.float32)

    out = jax.block_until_ready(smmlp_pallas(x, w_gate, w_up, w_down))
    ref = smmlp_reference(x.reshape(-1, hidden_size), w_gate, w_up, w_down)
    ref = ref.reshape(batch, seq, last_size)
    assert out.shape == (batch, seq, last_size)
    assert jnp.allclose(out, ref, atol=1e-5, rtol=1e-5), "mismatch vs reference (small)"

    # ---- Test 2: exercises row/reduction tiling and padding ---------------
    H2, I2, L2 = 200, 1000, 200
    B2, S2 = 5, 100
    k_x, k_g, k_u, k_d, key = jax.random.split(key, 5)
    x2 = jax.random.normal(k_x, (B2, S2, H2), dtype=jnp.float32)
    sh2, si2 = 1.0 / jnp.sqrt(H2), 1.0 / jnp.sqrt(I2)
    wg2 = jax.random.uniform(k_g, (H2, I2), minval=-sh2, maxval=sh2, dtype=jnp.float32)
    wu2 = jax.random.uniform(k_u, (H2, I2), minval=-sh2, maxval=sh2, dtype=jnp.float32)
    wd2 = jax.random.uniform(k_d, (I2, L2), minval=-si2, maxval=si2, dtype=jnp.float32)

    out2 = jax.block_until_ready(smmlp_pallas(x2, wg2, wu2, wd2))
    ref2 = smmlp_reference(x2.reshape(-1, H2), wg2, wu2, wd2).reshape(B2, S2, L2)
    assert out2.shape == (B2, S2, L2)
    assert jnp.allclose(out2, ref2, atol=1e-3, rtol=1e-3), "mismatch vs reference (tiled)"

    # ---- Test 3: bf16 path (f32 accumulator scratch + final cast) ---------
    H3, I3, L3 = 128, 256, 128
    B3, S3 = 4, 64
    k_x, k_g, k_u, k_d, key = jax.random.split(key, 5)
    x3 = jax.random.normal(k_x, (B3, S3, H3), dtype=jnp.float32).astype(jnp.bfloat16)
    sh3, si3 = 1.0 / jnp.sqrt(H3), 1.0 / jnp.sqrt(I3)
    wg3 = jax.random.uniform(k_g, (H3, I3), minval=-sh3, maxval=sh3).astype(jnp.bfloat16)
    wu3 = jax.random.uniform(k_u, (H3, I3), minval=-sh3, maxval=sh3).astype(jnp.bfloat16)
    wd3 = jax.random.uniform(k_d, (I3, L3), minval=-si3, maxval=si3).astype(jnp.bfloat16)

    out3 = jax.block_until_ready(smmlp_pallas(x3, wg3, wu3, wd3))
    ref3 = smmlp_reference(x3.reshape(-1, H3).astype(jnp.float32),
                           wg3.astype(jnp.float32), wu3.astype(jnp.float32),
                           wd3.astype(jnp.float32)).reshape(B3, S3, L3)
    assert out3.shape == (B3, S3, L3)
    assert jnp.allclose(out3.astype(jnp.float32), ref3, atol=2e-2, rtol=2e-2), \
        "mismatch vs reference (bf16)"

    print("KERNEL_OK")
</pallas_src>

<mosaic_0001>
module attributes {stable_mosaic.version = 11 : i64} {
  func.func @_smmlp_kernel_f32(%arg0: i32, %arg1: i32, %arg2: i32, %arg3: memref<16x128xf32, #tpu.memory_space<vmem>>, %arg4: memref<1x128x256xf32, #tpu.memory_space<vmem>>, %arg5: memref<128x128xf32, #tpu.memory_space<vmem>>, %arg6: memref<16x128xf32, #tpu.memory_space<vmem>>) attributes {dimension_semantics = [#tpu.dimension_semantics<parallel>, #tpu.dimension_semantics<parallel>, #tpu.dimension_semantics<arbitrary>], iteration_bounds = array<i64: 1, 1, 1>, scalar_prefetch = 0 : i64, scratch_operands = 0 : i64, tpu.core_type = #tpu.core_type<tc>, window_params = [{transform_indices = @transform_0, window_bounds = array<i64: 16, 128>}, {transform_indices = @transform_1, window_bounds = array<i64: 1, 128, 256>}, {transform_indices = @transform_2, window_bounds = array<i64: 128, 128>}, {transform_indices = @transform_3, window_bounds = array<i64: 16, 128>}]} {
    %c0 = arith.constant 0 : index
    %c0_0 = arith.constant 0 : index
    %0 = vector.load %arg3[%c0, %c0_0] : memref<16x128xf32, #tpu.memory_space<vmem>>, vector<16x128xf32>
    %c0_1 = arith.constant 0 : index
    %c0_2 = arith.constant 0 : index
    %c0_3 = arith.constant 0 : index
    %1 = vector.load %arg4[%c0_1, %c0_2, %c0_3] : memref<1x128x256xf32, #tpu.memory_space<vmem>>, vector<1x128x256xf32>
    %2 = vector.shape_cast %1 : vector<1x128x256xf32> to vector<128x256xf32>
    %cst = arith.constant dense<0.000000e+00> : vector<16x256xf32>
    %3 = tpu.matmul %0, %2, %cst {dimension_numbers = #tpu.dot_dimension_numbers<[1], [0], [0], [1], [0, 0, 1, 1], [], []>} : vector<16x128xf32>, vector<128x256xf32>, vector<16x256xf32> -> vector<16x256xf32>
    %4 = vector.extract_strided_slice %3 {offsets = [0, 0], sizes = [16, 128], strides = [1, 1]} : vector<16x256xf32> to vector<16x128xf32>
    %5 = vector.extract_strided_slice %3 {offsets = [0, 128], sizes = [16, 128], strides = [1, 1]} : vector<16x256xf32> to vector<16x128xf32>
    %6 = arith.negf %4 : vector<16x128xf32>
    %7 = math.exp %6 : vector<16x128xf32>
    %cst_4 = arith.constant 1.000000e+00 : f32
    %8 = vector.broadcast %cst_4 : f32 to vector<16x128xf32>
    %9 = arith.addf %8, %7 : vector<16x128xf32>
    %10 = arith.divf %8, %9 : vector<16x128xf32>
    %11 = arith.mulf %4, %10 : vector<16x128xf32>
    %12 = arith.mulf %11, %5 : vector<16x128xf32>
    %c0_5 = arith.constant 0 : index
    %c0_6 = arith.constant 0 : index
    %13 = vector.load %arg5[%c0_5, %c0_6] : memref<128x128xf32, #tpu.memory_space<vmem>>, vector<128x128xf32>
    %cst_7 = arith.constant dense<0.000000e+00> : vector<16x128xf32>
    %14 = tpu.matmul %12, %13, %cst_7 {dimension_numbers = #tpu.dot_dimension_numbers<[1], [0], [0], [1], [0, 0, 1, 1], [], []>} : vector<16x128xf32>, vector<128x128xf32>, vector<16x128xf32> -> vector<16x128xf32>
    %c0_i32 = arith.constant 0 : i32
    %15 = arith.cmpi eq, %arg2, %c0_i32 : i32
    %16 = arith.extui %15 : i1 to i32
    %c0_i32_8 = arith.constant 0 : i32
    %17 = arith.cmpi ne, %16, %c0_i32_8 : i32
    scf.if %17 {
      %c0_11 = arith.constant 0 : index
      %c0_12 = arith.constant 0 : index
      %21 = vector.load %arg6[%c0_11, %c0_12] : memref<16x128xf32, #tpu.memory_space<vmem>>, vector<16x128xf32>
      tpu.vector_store %arg6[%c0_11, %c0_12], %14 {strides = array<i32>} : memref<16x128xf32, #tpu.memory_space<vmem>>, vector<16x128xf32>,
    } else {
    }
    %c0_i32_9 = arith.constant 0 : i32
    %18 = arith.cmpi sgt, %arg2, %c0_i32_9 : i32
    %19 = arith.extui %18 : i1 to i32
    %c0_i32_10 = arith.constant 0 : i32
    %20 = arith.cmpi ne, %19, %c0_i32_10 : i32
    scf.if %20 {
      %c0_11 = arith.constant 0 : index
      %c0_12 = arith.constant 0 : index
      %21 = vector.load %arg6[%c0_11, %c0_12] : memref<16x128xf32, #tpu.memory_space<vmem>>, vector<16x128xf32>
      %22 = arith.addf %21, %14 : vector<16x128xf32>
      %c0_13 = arith.constant 0 : index
      %c0_14 = arith.constant 0 : index
      %23 = vector.load %arg6[%c0_13, %c0_14] : memref<16x128xf32, #tpu.memory_space<vmem>>, vector<16x128xf32>
      tpu.vector_store %arg6[%c0_13, %c0_14], %22 {strides = array<i32>} : memref<16x128xf32, #tpu.memory_space<vmem>>, vector<16x128xf32>,
    } else {
    }
    return
  }
  func.func @transform_0(%arg0: i32, %arg1: i32, %arg2: i32) -> (i32, i32) {
    %c0_i32 = arith.constant 0 : i32
    %c0_i32_0 = arith.constant 0 : i32
    return %arg0, %c0_i32 : i32, i32
  }
  func.func @transform_1(%arg0: i32, %arg1: i32, %arg2: i32) -> (i32, i32, i32) {
    %c0_i32 = arith.constant 0 : i32
    %c0_i32_0 = arith.constant 0 : i32
    %c0_i32_1 = arith.constant 0 : i32
    return %arg2, %c0_i32, %c0_i32_0 : i32, i32, i32
  }
  func.func @transform_2(%arg0: i32, %arg1: i32, %arg2: i32) -> (i32, i32) {
    %c0_i32 = arith.constant 0 : i32
    return %arg2, %arg1 : i32, i32
  }
  func.func @transform_3(%arg0: i32, %arg1: i32, %arg2: i32) -> (i32, i32) {
    %c0_i32 = arith.constant 0 : i32
    return %arg0, %arg1 : i32, i32
  }
}

</mosaic_0001>

<llo_original>
// kernel: tpu_custom_call.1
$region0: #{tpu_custom_call.1}
  #allocation0 [shape = 'u32[]', space=smem, size = 0x4, offset = 0x4, fixed_abs, tag = 'smem constant byte address 0x4 - core index']
  #allocation1 [shape = 'u32[144,128]{1,0:T(1,128)}', space=vmem, size = 0x12000, scoped, tag = 'internal scratch']
  %s0 = inlined_call_operand.hbm [shape: f32[16,128], index: 0, kind: input, shape index: {}]
  %s1 = inlined_call_operand.hbm [shape: f32[1,128,256], index: 1, kind: input, shape index: {}]
  %s2 = inlined_call_operand.hbm [shape: f32[128,128], index: 2, kind: input, shape index: {}]
  %s3 = inlined_call_operand.hbm [shape: f32[16,128], index: 3, kind: output, shape index: {}]
  %s4 = sld [smem:[#allocation0]]
  $region42: #{tpu_custom_call.1} parent=0
    _
  %s6 = ssub.s32 1, %s4
  %s7 = scalar_select 0, %s6, %s4
  $region1: #{tpu_custom_call.1} parent=0
    #allocation2 [shape = 'u8[8192]{0}', space=vmem, size = 0x2000, scoped, tag = 'input window, operand 0, single buffered']
    #allocation3 [shape = 's32[1]{0}', space=sflag, size = 0x4, scoped, tag = 'scoped memory for tpu_custom_call.1']
    #allocation4 [shape = 's32[1]{0}', space=sflag, size = 0x4, scoped, tag = 'scoped memory for tpu_custom_call.1']
    #allocation5 [shape = 'u8[131072]{0}', space=vmem, size = 0x20000, scoped, tag = 'input window, operand 1, single buffered']
    #allocation6 [shape = 's32[1]{0}', space=sflag, size = 0x4, scoped, tag = 'scoped memory for tpu_custom_call.1']
    #allocation7 [shape = 'u8[65536]{0}', space=vmem, size = 0x10000, scoped, tag = 'input window, operand 2, single buffered']
    #allocation8 [shape = 'u8[8192]{0}', space=vmem, size = 0x2000, scoped, tag = 'output window, operand 0, single buffered']
    %8 = vsyncpa [#allocation3], 0
    %9 = vsyncpa [#allocation6], 0
    %10 = vsyncpa [#allocation4], 0
    // Predicated region
    $region2: #{tpu_custom_call.1} parent=1 // pred_check
      _
    $region3: #{tpu_custom_call.1} parent=1 // pred_check_branch
      %12 = sbr.rel (0) target = $region5
    $region4: #{tpu_custom_call.1} parent=1 // pred_region
      %s14 = ssub.s32 256, 256
      %15 = vsyncadd [#allocation3], %s14
      %s16 = sshll.u32 [#allocation2], 4
      %s17 = int_to_ptr.vmem [resolvable:$true] %s16
      %22 = dma.hbm_to_vmem [thread:$0]  %s0, 256, %s17, [#allocation3], 128, 128, 8
    $region5: #{tpu_custom_call.1} parent=1 // pred_fallthru
      _
    // Predicated region
    $region6: #{tpu_custom_call.1} parent=1 // pred_check
      _
    $region7: #{tpu_custom_call.1} parent=1 // pred_check_branch
      %24 = sbr.rel (0) target = $region9
    $region8: #{tpu_custom_call.1} parent=1 // pred_region
      %s26 = ssub.s32 4096, 4096
      %27 = vsyncadd [#allocation6], %s26
      %s28 = sshll.u32 [#allocation5], 4
      %s29 = int_to_ptr.vmem [resolvable:$true] %s28
      %34 = dma.hbm_to_vmem [thread:$0]  %s1, 4096, %s29, [#allocation6], 256, 256, 16
    $region9: #{tpu_custom_call.1} parent=1 // pred_fallthru
      _
    // Predicated region
    $region10: #{tpu_custom_call.1} parent=1 // pred_check
      _
    $region11: #{tpu_custom_call.1} parent=1 // pred_check_branch
      %36 = sbr.rel (0) target = $region13
    $region12: #{tpu_custom_call.1} parent=1 // pred_region
      %s38 = ssub.s32 2048, 2048
      %39 = vsyncadd [#allocation6], %s38
      %s40 = sshll.u32 [#allocation7], 4
      %s41 = int_to_ptr.vmem [resolvable:$true] %s40
      %46 = dma.hbm_to_vmem [thread:$0]  %s2, 2048, %s41, [#allocation6], 128, 128, 8
    $region13: #{tpu_custom_call.1} parent=1 // pred_fallthru
      _
    // Predicated region
    $region14: #{tpu_custom_call.1} parent=1 // pred_check
      _
    $region15: #{tpu_custom_call.1} parent=1 // pred_check_branch
      %48 = sbr.rel (0) target = $region17
    $region16: #{tpu_custom_call.1} parent=1 // pred_region
      %49 = dma.done [#allocation3], 256
    $region17: #{tpu_custom_call.1} parent=1 // pred_fallthru
      _
    // Predicated region
    $region18: #{tpu_custom_call.1} parent=1 // pred_check
      _
    $region19: #{tpu_custom_call.1} parent=1 // pred_check_branch
      %51 = sbr.rel (0) target = $region21
    $region20: #{tpu_custom_call.1} parent=1 // pred_region
      %52 = dma.done [#allocation6], 4096
    $region21: #{tpu_custom_call.1} parent=1 // pred_fallthru
      _
    // Predicated region
    $region22: #{tpu_custom_call.1} parent=1 // pred_check
      _
    $region23: #{tpu_custom_call.1} parent=1 // pred_check_branch
      %54 = sbr.rel (0) target = $region25
    $region24: #{tpu_custom_call.1} parent=1 // pred_region
      %55 = dma.done [#allocation6], 2048
    $region25: #{tpu_custom_call.1} parent=1 // pred_fallthru
      _
    %v56 = vld [vmem:[#allocation2] sm:$0xff]
    %v57 = vld [vmem:[#allocation2 + $0x8] sm:$0xff]
    %v58 = vld [vmem:[#allocation5] sm:$0xff]
    %v59 = vld [vmem:[#allocation5 + $0x8] sm:$0xff]
    %v60 = vld [vmem:[#allocation5 + $0x10] sm:$0xff]
    %v61 = vld [vmem:[#allocation5 + $0x18] sm:$0xff]
    %v62 = vld [vmem:[#allocation5 + $0x20] sm:$0xff]
    %v63 = vld [vmem:[#allocation5 + $0x28] sm:$0xff]
    %v64 = vld [vmem:[#allocation5 + $0x30] sm:$0xff]
    %v65 = vld [vmem:[#allocation5 + $0x38] sm:$0xff]
    %v66 = vld [vmem:[#allocation5 + $0x40] sm:$0xff]
    %v67 = vld [vmem:[#allocation5 + $0x48] sm:$0xff]
    %v68 = vld [vmem:[#allocation5 + $0x50] sm:$0xff]
    %v69 = vld [vmem:[#allocation5 + $0x58] sm:$0xff]
    %v70 = vld [vmem:[#allocation5 + $0x60] sm:$0xff]
    %v71 = vld [vmem:[#allocation5 + $0x68] sm:$0xff]
    %v72 = vld [vmem:[#allocation5 + $0x70] sm:$0xff]
    %v73 = vld [vmem:[#allocation5 + $0x78] sm:$0xff]
    %v74 = vld [vmem:[#allocation5 + $0x80] sm:$0xff]
    %v75 = vld [vmem:[#allocation5 + $0x88] sm:$0xff]
    %v76 = vld [vmem:[#allocation5 + $0x90] sm:$0xff]
    %v77 = vld [vmem:[#allocation5 + $0x98] sm:$0xff]
    %v78 = vld [vmem:[#allocation5 + $0xa0] sm:$0xff]
    %v79 = vld [vmem:[#allocation5 + $0xa8] sm:$0xff]
    %v80 = vld [vmem:[#allocation5 + $0xb0] sm:$0xff]
    %v81 = vld [vmem:[#allocation5 + $0xb8] sm:$0xff]
    %v82 = vld [vmem:[#allocation5 + $0xc0] sm:$0xff]
    %v83 = vld [vmem:[#allocation5 + $0xc8] sm:$0xff]
    %v84 = vld [vmem:[#allocation5 + $0xd0] sm:$0xff]
    %v85 = vld [vmem:[#allocation5 + $0xd8] sm:$0xff]
    %v86 = vld [vmem:[#allocation5 + $0xe0] sm:$0xff]
    %v87 = vld [vmem:[#allocation5 + $0xe8] sm:$0xff]
    %v88 = vld [vmem:[#allocation5 + $0xf0] sm:$0xff]
    %v89 = vld [vmem:[#allocation5 + $0xf8] sm:$0xff]
    %90 = vmatprep.subr.mxu0 %v89
    %91 = vmatpush1.msra.mxu0 %v88
    %92 = vmatprep.subr.mxu0 %v87
    %93 = vmatpush1.msra.mxu0 %v86
    %94 = vmatprep.subr.mxu0 %v85
    %95 = vmatpush1.msra.mxu0 %v84
    %96 = vmatprep.subr.mxu0 %v83
    %97 = vmatpush1.msra.mxu0 %v82
    %98 = vmatprep.subr.mxu0 %v81
    %99 = vmatpush1.msra.mxu0 %v80
    %100 = vmatprep.subr.mxu0 %v79
    %101 = vmatpush1.msra.mxu0 %v78
    %102 = vmatprep.subr.mxu0 %v77
    %103 = vmatpush1.msra.mxu0 %v76
    %104 = vmatprep.subr.mxu0 %v75
    %105 = vmatpush1.msra.mxu0 %v74
    %106 = vmatprep.subr.mxu0 %v73
    %107 = vmatpush1.msra.mxu0 %v72
    %108 = vmatprep.subr.mxu0 %v71
    %109 = vmatpush1.msra.mxu0 %v70
    %110 = vmatprep.subr.mxu0 %v69
    %111 = vmatpush1.msra.mxu0 %v68
    %112 = vmatprep.subr.mxu0 %v67
    %113 = vmatpush1.msra.mxu0 %v66
    %114 = vmatprep.subr.mxu0 %v65
    %115 = vmatpush1.msra.mxu0 %v64
    %116 = vmatprep.subr.mxu0 %v63
    %117 = vmatpush1.msra.mxu0 %v62
    %118 = vmatprep.subr.mxu0 %v61
    %119 = vmatpush1.msra.mxu0 %v60
    %120 = vmatprep.subr.mxu0 %v59
    %121 = vmatpush1.msra.mxu0 %v58
    %122 = vmatprep.subr.mxu0 0.0
    %123 = vmatpush2.msra.mxu0 0.0
    %124 = vmatprep.subr.mxu0 0.0
    %125 = vmatpush2.msra.mxu0 0.0
    %126 = vmatprep.subr.mxu0 0.0
    %127 = vmatpush2.msra.mxu0 0.0
    %128 = vmatprep.subr.mxu0 0.0
    %129 = vmatpush2.msra.mxu0 0.0
    %130 = vmatprep.subr.mxu0 0.0
    %131 = vmatpush2.msra.mxu0 0.0
    %132 = vmatprep.subr.mxu0 0.0
    %133 = vmatpush2.msra.mxu0 0.0
    %134 = vmatprep.subr.mxu0 0.0
    %135 = vmatpush2.msra.mxu0 0.0
    %136 = vmatprep.subr.mxu0 0.0
    %137 = vmatpush2.msra.mxu0 0.0
    %138 = vmatprep.subr.mxu0 0.0
    %139 = vmatpush2.msra.mxu0 0.0
    %140 = vmatprep.subr.mxu0 0.0
    %141 = vmatpush2.msra.mxu0 0.0
    %142 = vmatprep.subr.mxu0 0.0
    %143 = vmatpush2.msra.mxu0 0.0
    %144 = vmatprep.subr.mxu0 0.0
    %145 = vmatpush2.msra.mxu0 0.0
    %146 = vmatprep.subr.mxu0 0.0
    %147 = vmatpush2.msra.mxu0 0.0
    %148 = vmatprep.subr.mxu0 0.0
    %149 = vmatpush2.msra.mxu0 0.0
    %150 = vmatprep.subr.mxu0 0.0
    %151 = vmatpush2.msra.mxu0 0.0
    %152 = vmatprep.subr.mxu0 0.0
    %153 = vmatpush2.msra.mxu0 0.0
    %154 = vmatprep.mubr.f32.mxu0 0.0
    %155 = vmatmul.mubr.f32.gmra.mxu0 %v56
    %v156 = vpop.f32.mrf.mxu0
    %v157 = vadd.f32 0.0, %v156
    %v158 = vpop.f32.mrf.mxu0
    %v159 = vadd.f32 0.0, %v158
    %160 = vmatprep.mubr.f32.mxu0 0.0
    %161 = vmatmul.mubr.f32.gmra.mxu0 %v57
    %v162 = vpop.f32.mrf.mxu0
    %v163 = vadd.f32 0.0, %v162
    %v164 = vpop.f32.mrf.mxu0
    %v165 = vadd.f32 0.0, %v164
    %166 = vdwg.mxu0
    %v167 = vxor.u32 %v157, 2147483648
    %v168 = vxor.u32 %v163, 2147483648
    %v169 = vmul.f32 %v167, 1.442695
    %v170 = vpow.pop %v169
    %v171 = vmul.f32 %v168, 1.442695
    %v172 = vpow.pop %v171
    %v173 = vadd.f32 %v170, 1.0
    %v174 = vadd.f32 %v172, 1.0
    %v175 = vrcp.pop %v173
    %v176 = vmul.f32 1.0, %v175
    %v177 = vrcp.pop %v174
    %v178 = vmul.f32 1.0, %v177
    %v179 = vmul.f32 %v157, %v176
    %v180 = vmul.f32 %v163, %v178
    %v181 = vmul.f32 %v179, %v159
    %v182 = vmul.f32 %v180, %v165
    %v183 = vld [vmem:[#allocation7] sm:$0xff]
    %v184 = vld [vmem:[#allocation7 + $0x8] sm:$0xff]
    %v185 = vld [vmem:[#allocation7 + $0x10] sm:$0xff]
    %v186 = vld [vmem:[#allocation7 + $0x18] sm:$0xff]
    %v187 = vld [vmem:[#allocation7 + $0x20] sm:$0xff]
    %v188 = vld [vmem:[#allocation7 + $0x28] sm:$0xff]
    %v189 = vld [vmem:[#allocation7 + $0x30] sm:$0xff]
    %v190 = vld [vmem:[#allocation7 + $0x38] sm:$0xff]
    %v191 = vld [vmem:[#allocation7 + $0x40] sm:$0xff]
    %v192 = vld [vmem:[#allocation7 + $0x48] sm:$0xff]
    %v193 = vld [vmem:[#allocation7 + $0x50] sm:$0xff]
    %v194 = vld [vmem:[#allocation7 + $0x58] sm:$0xff]
    %v195 = vld [vmem:[#allocation7 + $0x60] sm:$0xff]
    %v196 = vld [vmem:[#allocation7 + $0x68] sm:$0xff]
    %v197 = vld [vmem:[#allocation7 + $0x70] sm:$0xff]
    %v198 = vld [vmem:[#allocation7 + $0x78] sm:$0xff]
    %199 = vmatprep.subr.mxu0 0.0
    %200 = vmatpush1.msra.mxu0 %v198
    %201 = vmatprep.subr.mxu0 0.0
    %202 = vmatpush1.msra.mxu0 %v197
    %203 = vmatprep.subr.mxu0 0.0
    %204 = vmatpush1.msra.mxu0 %v196
    %205 = vmatprep.subr.mxu0 0.0
    %206 = vmatpush1.msra.mxu0 %v195
    %207 = vmatprep.subr.mxu0 0.0
    %208 = vmatpush1.msra.mxu0 %v194
    %209 = vmatprep.subr.mxu0 0.0
    %210 = vmatpush1.msra.mxu0 %v193
    %211 = vmatprep.subr.mxu0 0.0
    %212 = vmatpush1.msra.mxu0 %v192
    %213 = vmatprep.subr.mxu0 0.0
    %214 = vmatpush1.msra.mxu0 %v191
    %215 = vmatprep.subr.mxu0 0.0
    %216 = vmatpush1.msra.mxu0 %v190
    %217 = vmatprep.subr.mxu0 0.0
    %218 = vmatpush1.msra.mxu0 %v189
    %219 = vmatprep.subr.mxu0 0.0
    %220 = vmatpush1.msra.mxu0 %v188
    %221 = vmatprep.subr.mxu0 0.0
    %222 = vmatpush1.msra.mxu0 %v187
    %223 = vmatprep.subr.mxu0 0.0
    %224 = vmatpush1.msra.mxu0 %v186
    %225 = vmatprep.subr.mxu0 0.0
    %226 = vmatpush1.msra.mxu0 %v185
    %227 = vmatprep.subr.mxu0 0.0
    %228 = vmatpush1.msra.mxu0 %v184
    %229 = vmatprep.subr.mxu0 0.0
    %230 = vmatpush1.msra.mxu0 %v183
    %231 = vmatprep.subr.mxu0 0.0
    %232 = vmatpush2.msra.mxu0 0.0
    %233 = vmatprep.subr.mxu0 0.0
    %234 = vmatpush2.msra.mxu0 0.0
    %235 = vmatprep.subr.mxu0 0.0
    %236 = vmatpush2.msra.mxu0 0.0
    %237 = vmatprep.subr.mxu0 0.0
    %238 = vmatpush2.msra.mxu0 0.0
    %239 = vmatprep.subr.mxu0 0.0
    %240 = vmatpush2.msra.mxu0 0.0
    %241 = vmatprep.subr.mxu0 0.0
    %242 = vmatpush2.msra.mxu0 0.0
    %243 = vmatprep.subr.mxu0 0.0
    %244 = vmatpush2.msra.mxu0 0.0
    %245 = vmatprep.subr.mxu0 0.0
    %246 = vmatpush2.msra.mxu0 0.0
    %247 = vmatprep.subr.mxu0 0.0
    %248 = vmatpush2.msra.mxu0 0.0
    %249 = vmatprep.subr.mxu0 0.0
    %250 = vmatpush2.msra.mxu0 0.0
    %251 = vmatprep.subr.mxu0 0.0
    %252 = vmatpush2.msra.mxu0 0.0
    %253 = vmatprep.subr.mxu0 0.0
    %254 = vmatpush2.msra.mxu0 0.0
    %255 = vmatprep.subr.mxu0 0.0
    %256 = vmatpush2.msra.mxu0 0.0
    %257 = vmatprep.subr.mxu0 0.0
    %258 = vmatpush2.msra.mxu0 0.0
    %259 = vmatprep.subr.mxu0 0.0
    %260 = vmatpush2.msra.mxu0 0.0
    %261 = vmatprep.subr.mxu0 0.0
    %262 = vmatpush2.msra.mxu0 0.0
    %263 = vmatprep.mubr.f32.mxu0 0.0
    %264 = vmatmul.mubr.f32.gmra.mxu0 %v181
    %v265 = vpop.f32.mrf.mxu0
    %v266 = vadd.f32 0.0, %v265
    %v267 = vpop.f32.mrf.mxu0
    %268 = vmatprep.mubr.f32.mxu0 0.0
    %269 = vmatmul.mubr.f32.gmra.mxu0 %v182
    %v270 = vpop.f32.mrf.mxu0
    %v271 = vadd.f32 0.0, %v270
    %v272 = vpop.f32.mrf.mxu0
    %273 = vdwg.mxu0
    %p274 = scmp.eq.s32.totalorder 0, 0
    // Predicated region
    $region26: #{tpu_custom_call.1} parent=1 // pred_check
      %p275 = pneg %p274
    $region27: #{tpu_custom_call.1} parent=1 // pred_check_branch
      %277 = sbr.rel (%p275) target = $region29
    $region28: #{tpu_custom_call.1} parent=1 // pred_region
      %278 = vst [vmem:[#allocation8] sm:$0xff] %v266
      %279 = vst [vmem:[#allocation8 + $0x8] sm:$0xff] %v271
    $region29: #{tpu_custom_call.1} parent=1 // pred_fallthru
      _
    %p280 = scmp.gt.s32.totalorder 0, 0
    // Predicated region
    $region30: #{tpu_custom_call.1} parent=1 // pred_check
      %p281 = pneg %p280
    $region31: #{tpu_custom_call.1} parent=1 // pred_check_branch
      %283 = sbr.rel (%p281) target = $region33
    $region32: #{tpu_custom_call.1} parent=1 // pred_region
      %v284 = vld [vmem:[#allocation8] sm:$0xff]
      %v285 = vld [vmem:[#allocation8 + $0x8] sm:$0xff]
      %v286 = vadd.f32 %v284, %v266
      %v287 = vadd.f32 %v285, %v271
      %288 = vst [vmem:[#allocation8] sm:$0xff] %v286
      %289 = vst [vmem:[#allocation8 + $0x8] sm:$0xff] %v287
    $region33: #{tpu_custom_call.1} parent=1 // pred_fallthru
      _
    // Predicated region
    $region34: #{tpu_custom_call.1} parent=1 // pred_check
      _
    $region35: #{tpu_custom_call.1} parent=1 // pred_check_branch
      %291 = sbr.rel (0) target = $region37
    $region36: #{tpu_custom_call.1} parent=1 // pred_region
      %s293 = ssub.s32 256, 256
      %294 = vsyncadd [#allocation4], %s293
      %s295 = sshll.u32 [#allocation8], 4
      %s296 = int_to_ptr.vmem [resolvable:$true] %s295
      %301 = dma.vmem_to_hbm [thread:$0]  %s296, 256, %s3, [#allocation4], 128, 128, 8
    $region37: #{tpu_custom_call.1} parent=1 // pred_fallthru
      _
    // Predicated region
    $region38: #{tpu_custom_call.1} parent=1 // pred_check
      _
    $region39: #{tpu_custom_call.1} parent=1 // pred_check_branch
      %303 = sbr.rel (0) target = $region41
    $region40: #{tpu_custom_call.1} parent=1 // pred_region
      %304 = dma.done [#allocation4], 256
    $region41: #{tpu_custom_call.1} parent=1 // pred_fallthru
      _
    %305 = vsyncpa [#allocation3], 1
    %306 = vsyncpa [#allocation6], 1
    %307 = vsyncpa [#allocation4], 1

</llo_original>
